<compile_context>
chip_gen: v7x
topology: tpu7x:2x2x1
jax: 0.10.0
libtpu: 0.0.40
codegen_flags: <defaults>
</compile_context>

<pallas_src>
import functools

import numpy as np
import jax
import jax.numpy as jnp
from jax.experimental import pallas as pl
from jax.experimental.pallas import tpu as pltpu


# ----------------------------------------------------------------------------
# Helpers
# ----------------------------------------------------------------------------
def _round_up(x, m):
    return (x + m - 1) // m * m


def _im2col_3x3_nhwc(x):
    """x: (B, H, W, C) -> (B*H*W, 9*C), stride 1, pad 1 (PyTorch 'same' 3x3)."""
    B, H, W, C = x.shape
    xp = jnp.pad(x, ((0, 0), (1, 1), (1, 1), (0, 0)))
    cols = [xp[:, i:i + H, j:j + W, :] for i in range(3) for j in range(3)]
    return jnp.concatenate(cols, axis=-1).reshape(B * H * W, 9 * C)


# ----------------------------------------------------------------------------
# Fused Pallas kernel:
#   out = epilogue( relu?(A * pre_s + pre_t) @ B )        (MXU in bf16, f32 acc)
#   epilogue: y = acc * post_s + post_t ; optional ReLU ; optional += residual
# ----------------------------------------------------------------------------
def _fused_matmul_kernel(*refs, pre_act, post_relu, has_res):
    a_ref, b_ref = refs[0], refs[1]
    idx = 2
    if pre_act:
        pre_s_ref, pre_t_ref = refs[2], refs[3]
        idx = 4
    post_s_ref, post_t_ref = refs[idx], refs[idx + 1]
    idx += 2
    if has_res:
        res_ref = refs[idx]
        idx += 1
    o_ref, acc_ref = refs[idx], refs[idx + 1]

    k = pl.program_id(2)

    @pl.when(k == 0)
    def _():
        acc_ref[...] = jnp.zeros_like(acc_ref)

    a = a_ref[...]
    if pre_act:
        # Pre-activation BN + ReLU on the input channels (per K column), f32 math.
        a = jnp.maximum(a.astype(jnp.float32) * pre_s_ref[...] + pre_t_ref[...], 0.0)
        a = a.astype(jnp.bfloat16)
    acc_ref[...] += jnp.dot(a, b_ref[...], preferred_element_type=jnp.float32)

    @pl.when(k == pl.num_programs(2) - 1)
    def _():
        y = acc_ref[...] * post_s_ref[...] + post_t_ref[...]
        if post_relu:
            y = jnp.maximum(y, 0.0)
        if has_res:
            y = y + res_ref[...].astype(jnp.float32)
        o_ref[...] = y.astype(o_ref.dtype)


def fused_matmul(a, b, *, post_scale, post_shift, pre=None, post_relu=False,
                 residual=None, out_dtype=jnp.bfloat16):
    """relu?(a*pre_s+pre_t) @ b, then *post_scale + post_shift, relu?, +residual?."""
    M, K = a.shape
    K2, N = b.shape
    assert K == K2

    a = a.astype(jnp.bfloat16)
    b = b.astype(jnp.bfloat16)

    # Tiles: single K step / full N width at these shapes; M tiled for parallelism.
    TM = min(256, _round_up(M, 8))
    TN = min(512, _round_up(N, 128))
    TK = min(2048, _round_up(K, 128))
    Mp, Kp, Np = _round_up(M, TM), _round_up(K, TK), _round_up(N, TN)

    a = jnp.pad(a, ((0, Mp - M), (0, Kp - K)))
    b = jnp.pad(b, ((0, Kp - K), (0, Np - N)))
    post_s = jnp.pad(post_scale.astype(jnp.float32), (0, Np - N)).reshape(1, Np)
    post_t = jnp.pad(post_shift.astype(jnp.float32), (0, Np - N)).reshape(1, Np)

    inputs = [a, b]
    in_specs = [pl.BlockSpec((TM, TK), lambda i, j, k: (i, k)),
                pl.BlockSpec((TK, TN), lambda i, j, k: (k, j))]

    if pre is not None:
        pre_s = jnp.pad(pre[0].astype(jnp.float32), (0, Kp - K)).reshape(1, Kp)
        pre_t = jnp.pad(pre[1].astype(jnp.float32), (0, Kp - K)).reshape(1, Kp)
        inputs += [pre_s, pre_t]
        in_specs += [pl.BlockSpec((1, TK), lambda i, j, k: (0, k)),
                     pl.BlockSpec((1, TK), lambda i, j, k: (0, k))]

    inputs += [post_s, post_t]
    in_specs += [pl.BlockSpec((1, TN), lambda i, j, k: (0, j)),
                 pl.BlockSpec((1, TN), lambda i, j, k: (0, j))]

    if residual is not None:
        r = jnp.pad(residual.astype(jnp.bfloat16), ((0, Mp - M), (0, Np - N)))
        inputs.append(r)
        in_specs.append(pl.BlockSpec((TM, TN), lambda i, j, k: (i, j)))

    kernel = functools.partial(_fused_matmul_kernel,
                               pre_act=pre is not None,
                               post_relu=post_relu,
                               has_res=residual is not None)

    out = pl.pallas_call(
        kernel,
        out_shape=jax.ShapeDtypeStruct((Mp, Np), out_dtype),
        grid_spec=pltpu.PrefetchScalarGridSpec(
            num_scalar_prefetch=0,
            grid=(Mp // TM, Np // TN, Kp // TK),
            in_specs=in_specs,
            out_specs=pl.BlockSpec((TM, TN), lambda i, j, k: (i, j)),
            scratch_shapes=[pltpu.VMEM((TM, TN), jnp.float32)],
        ),
        compiler_params=pltpu.CompilerParams(
            dimension_semantics=("parallel", "parallel", "arbitrary")),
    )(*inputs)
    return out[:M, :N]


# ----------------------------------------------------------------------------
# Parameter construction (eval-mode BatchNorm, PyTorch Conv2d weight layout)
# ----------------------------------------------------------------------------
class KeyGen:
    def __init__(self, seed):
        self._key = jax.random.PRNGKey(seed)

    def __call__(self):
        self._key, k = jax.random.split(self._key)
        return k


def init_conv(kg, cin, cout, k):
    w = jax.random.normal(kg(), (cout, cin, k, k), jnp.float32) / np.sqrt(cin * k * k)
    b = 0.01 * jax.random.normal(kg(), (cout,), jnp.float32)
    return {"w": w, "b": b}


def init_bn(kg, c):
    return {
        "gamma": 1.0 + 0.01 * jax.random.normal(kg(), (c,), jnp.float32),
        "beta": 0.01 * jax.random.normal(kg(), (c,), jnp.float32),
        "mean": 0.01 * jax.random.normal(kg(), (c,), jnp.float32),
        "var": 1.0 + 0.01 * jnp.abs(jax.random.normal(kg(), (c,), jnp.float32)),
    }


def init_residual(kg, inp_dim, out_dim):
    mid = out_dim // 2
    return {
        "bn1": init_bn(kg, inp_dim),
        "conv1": init_conv(kg, inp_dim, mid, 1),
        "bn2": init_bn(kg, mid),
        "conv2": init_conv(kg, mid, mid, 3),
        "bn3": init_bn(kg, mid),
        "conv3": init_conv(kg, mid, out_dim, 1),
        "skip": init_conv(kg, inp_dim, out_dim, 1),
    }


def fold_params(p):
    """Fold eval-mode BN + conv bias into per-channel scale/shift; reshape weights."""
    eps = 1e-5

    def bn_ss(bn):
        s = bn["gamma"] / jnp.sqrt(bn["var"] + eps)
        return s, bn["beta"] - bn["mean"] * s

    s1, t1 = bn_ss(p["bn1"])
    s2, t2 = bn_ss(p["bn2"])
    s3, t3 = bn_ss(p["bn3"])

    w1 = p["conv1"]["w"][:, :, 0, 0].T                                    # (Cin, mid)
    w2 = p["conv2"]["w"].transpose(2, 3, 1, 0).reshape(-1, p["conv2"]["w"].shape[0])
    w3 = p["conv3"]["w"][:, :, 0, 0].T                                    # (mid, out)
    wsk = p["skip"]["w"][:, :, 0, 0].T                                    # (Cin, out)

    return {
        "pre_s": s1, "pre_t": t1,                                          # bn1 on x
        "w1": w1, "post_s1": s2, "post_t1": p["conv1"]["b"] * s2 + t2,     # bn2(conv1)
        "w2": w2, "post_s2": s3, "post_t2": p["conv2"]["b"] * s3 + t3,     # bn3(conv2)
        "w3": w3, "b3": p["conv3"]["b"],
        "w_skip": wsk, "b_skip": p["skip"]["b"],
    }


# ----------------------------------------------------------------------------
# Residual forward (Pallas) and a pure-JAX mirror reference
# ----------------------------------------------------------------------------
def residual_forward(x_nchw, fp, need_skip):
    B, C, H, W = x_nchw.shape
    mid = fp["w1"].shape[1]
    out_dim = fp["w3"].shape[1]
    M = B * H * W

    x2d = x_nchw.transpose(0, 2, 3, 1).reshape(M, C).astype(jnp.bfloat16)

    # residual path: skip_layer(x) (1x1 conv + bias) or identity
    if need_skip:
        res = fused_matmul(x2d, fp["w_skip"],
                           post_scale=jnp.ones((out_dim,), jnp.float32),
                           post_shift=fp["b_skip"],
                           out_dtype=jnp.bfloat16)
    else:
        res = x2d

    # stage 1: relu(bn1(x)) -> conv1 (1x1) ; fused epilogue = bn2 + relu
    h1 = fused_matmul(x2d, fp["w1"],
                      pre=(fp["pre_s"], fp["pre_t"]),
                      post_scale=fp["post_s1"], post_shift=fp["post_t1"],
                      post_relu=True, out_dtype=jnp.bfloat16)

    # stage 2: conv2 (3x3, pad 1) on already-activated h1 ; epilogue = bn3 + relu
    a2 = _im2col_3x3_nhwc(h1.reshape(B, H, W, mid))
    h2 = fused_matmul(a2, fp["w2"],
                      post_scale=fp["post_s2"], post_shift=fp["post_t2"],
                      post_relu=True, out_dtype=jnp.bfloat16)

    # stage 3: conv3 (1x1) + bias + residual, f32 output
    out2d = fused_matmul(h2, fp["w3"],
                         post_scale=jnp.ones((out_dim,), jnp.float32),
                         post_shift=fp["b3"], residual=res,
                         out_dtype=jnp.float32)

    return out2d.reshape(B, H, W, out_dim).transpose(0, 3, 1, 2)


def residual_reference(x_nchw, fp, need_skip):
    """Plain-JAX mirror of the Pallas pipeline (same bf16 rounding points)."""
    bf = lambda v: v.astype(jnp.bfloat16).astype(jnp.float32)
    hi = jax.lax.Precision.HIGHEST
    B, C, H, W = x_nchw.shape
    mid = fp["w1"].shape[1]
    out_dim = fp["w3"].shape[1]
    M = B * H * W

    x2d = bf(x_nchw.transpose(0, 2, 3, 1).reshape(M, C))
    if need_skip:
        res = bf(jnp.dot(x2d, bf(fp["w_skip"]), precision=hi) + fp["b_skip"])
    else:
        res = x2d
    a1 = bf(jnp.maximum(x2d * fp["pre_s"] + fp["pre_t"], 0.0))
    h1 = bf(jnp.maximum(jnp.dot(a1, bf(fp["w1"]), precision=hi)
                        * fp["post_s1"] + fp["post_t1"], 0.0))
    a2 = _im2col_3x3_nhwc(h1.reshape(B, H, W, mid))
    h2 = bf(jnp.maximum(jnp.dot(bf(a2), bf(fp["w2"]), precision=hi)
                        * fp["post_s2"] + fp["post_t2"], 0.0))
    out2d = jnp.dot(h2, bf(fp["w3"]), precision=hi) + fp["b3"] + res
    return out2d.reshape(B, H, W, out_dim).transpose(0, 3, 1, 2)


# ----------------------------------------------------------------------------
# Main
# ----------------------------------------------------------------------------
if __name__ == "__main__":
    inp_dim, out_dim = 32, 64          # inp != out -> need_skip = True (skip_layer used)
    B, H, W = 2, 16, 16
    need_skip = inp_dim != out_dim

    params = init_residual(KeyGen(0), inp_dim, out_dim)
    fp = fold_params(params)

    x = jax.random.normal(jax.random.PRNGKey(0), (B, inp_dim, H, W), jnp.float32)

    out = residual_forward(x, fp, need_skip)
    jax.block_until_ready(out)

    assert out.shape == (B, out_dim, H, W), out.shape
    assert bool(jnp.all(jnp.isfinite(out)))

    ref = residual_reference(x, fp, need_skip)
    max_err = float(jnp.max(jnp.abs(out - ref)))
    assert max_err < 5e-2, f"mismatch vs reference: {max_err}"

    print("KERNEL_OK")
</pallas_src>

<mosaic_0001>
module attributes {stable_mosaic.version = 11 : i64} {
  func.func @_fused_matmul_kernel(%arg0: i32, %arg1: i32, %arg2: i32, %arg3: memref<256x128xbf16, #tpu.memory_space<vmem>>, %arg4: memref<128x128xbf16, #tpu.memory_space<vmem>>, %arg5: memref<1x128xf32, #tpu.memory_space<vmem>>, %arg6: memref<1x128xf32, #tpu.memory_space<vmem>>, %arg7: memref<256x128xbf16, #tpu.memory_space<vmem>>, %arg8: memref<256x128xf32, #tpu.memory_space<vmem>>) attributes {dimension_semantics = [#tpu.dimension_semantics<parallel>, #tpu.dimension_semantics<parallel>, #tpu.dimension_semantics<arbitrary>], iteration_bounds = array<i64: 2, 1, 1>, scalar_prefetch = 0 : i64, scratch_operands = 1 : i64, tpu.core_type = #tpu.core_type<tc>, window_params = [{transform_indices = @transform_0, window_bounds = array<i64: 256, 128>}, {transform_indices = @transform_1, window_bounds = array<i64: 128, 128>}, {transform_indices = @transform_2, window_bounds = array<i64: 1, 128>}, {transform_indices = @transform_3, window_bounds = array<i64: 1, 128>}, {transform_indices = @transform_4, window_bounds = array<i64: 256, 128>}]} {
    %c0_i32 = arith.constant 0 : i32
    %0 = arith.cmpi eq, %arg2, %c0_i32 : i32
    %1 = arith.extui %0 : i1 to i32
    %c0_i32_0 = arith.constant 0 : i32
    %2 = arith.cmpi ne, %1, %c0_i32_0 : i32
    scf.if %2 {
      %cst_10 = arith.constant 0.000000e+00 : f32
      %12 = vector.broadcast %cst_10 : f32 to vector<256x128xf32>
      %c0_11 = arith.constant 0 : index
      %c0_12 = arith.constant 0 : index
      %13 = vector.load %arg8[%c0_11, %c0_12] : memref<256x128xf32, #tpu.memory_space<vmem>>, vector<256x128xf32>
      tpu.vector_store %arg8[%c0_11, %c0_12], %12 {strides = array<i32>} : memref<256x128xf32, #tpu.memory_space<vmem>>, vector<256x128xf32>,
    } else {
    }
    %c0 = arith.constant 0 : index
    %c0_1 = arith.constant 0 : index
    %3 = vector.load %arg3[%c0, %c0_1] : memref<256x128xbf16, #tpu.memory_space<vmem>>, vector<256x128xbf16>
    %c0_2 = arith.constant 0 : index
    %c0_3 = arith.constant 0 : index
    %4 = vector.load %arg8[%c0_2, %c0_3] : memref<256x128xf32, #tpu.memory_space<vmem>>, vector<256x128xf32>
    %c0_4 = arith.constant 0 : index
    %c0_5 = arith.constant 0 : index
    %5 = vector.load %arg4[%c0_4, %c0_5] : memref<128x128xbf16, #tpu.memory_space<vmem>>, vector<128x128xbf16>
    %cst = arith.constant dense<0.000000e+00> : vector<256x128xf32>
    %6 = tpu.matmul %3, %5, %cst {dimension_numbers = #tpu.dot_dimension_numbers<[1], [0], [0], [1], [0, 0, 1, 1], [], []>} : vector<256x128xbf16>, vector<128x128xbf16>, vector<256x128xf32> -> vector<256x128xf32>
    %7 = arith.addf %4, %6 : vector<256x128xf32>
    %c0_6 = arith.constant 0 : index
    %c0_7 = arith.constant 0 : index
    %8 = vector.load %arg8[%c0_6, %c0_7] : memref<256x128xf32, #tpu.memory_space<vmem>>, vector<256x128xf32>
    tpu.vector_store %arg8[%c0_6, %c0_7], %7 {strides = array<i32>} : memref<256x128xf32, #tpu.memory_space<vmem>>, vector<256x128xf32>,
    %c0_i32_8 = arith.constant 0 : i32
    %9 = arith.cmpi eq, %arg2, %c0_i32_8 : i32
    %10 = arith.extui %9 : i1 to i32
    %c0_i32_9 = arith.constant 0 : i32
    %11 = arith.cmpi ne, %10, %c0_i32_9 : i32
    scf.if %11 {
      %c0_10 = arith.constant 0 : index
      %c0_11 = arith.constant 0 : index
      %12 = vector.load %arg8[%c0_10, %c0_11] : memref<256x128xf32, #tpu.memory_space<vmem>>, vector<256x128xf32>
      %c0_12 = arith.constant 0 : index
      %c0_13 = arith.constant 0 : index
      %13 = vector.load %arg5[%c0_12, %c0_13] : memref<1x128xf32, #tpu.memory_space<vmem>>, vector<1x128xf32>
      %14 = vector.broadcast %13 : vector<1x128xf32> to vector<256x128xf32>
      %15 = arith.mulf %12, %14 : vector<256x128xf32>
      %c0_14 = arith.constant 0 : index
      %c0_15 = arith.constant 0 : index
      %16 = vector.load %arg6[%c0_14, %c0_15] : memref<1x128xf32, #tpu.memory_space<vmem>>, vector<1x128xf32>
      %17 = vector.broadcast %16 : vector<1x128xf32> to vector<256x128xf32>
      %18 = arith.addf %15, %17 : vector<256x128xf32>
      %19 = arith.truncf %18 : vector<256x128xf32> to vector<256x128xbf16>
      %c0_16 = arith.constant 0 : index
      %c0_17 = arith.constant 0 : index
      %20 = vector.load %arg7[%c0_16, %c0_17] : memref<256x128xbf16, #tpu.memory_space<vmem>>, vector<256x128xbf16>
      tpu.vector_store %arg7[%c0_16, %c0_17], %19 {strides = array<i32>} : memref<256x128xbf16, #tpu.memory_space<vmem>>, vector<256x128xbf16>,
    } else {
    }
    return
  }
  func.func @transform_0(%arg0: i32, %arg1: i32, %arg2: i32) -> (i32, i32) {
    %c0_i32 = arith.constant 0 : i32
    return %arg0, %arg2 : i32, i32
  }
  func.func @transform_1(%arg0: i32, %arg1: i32, %arg2: i32) -> (i32, i32) {
    %c0_i32 = arith.constant 0 : i32
    return %arg2, %arg1 : i32, i32
  }
  func.func @transform_2(%arg0: i32, %arg1: i32, %arg2: i32) -> (i32, i32) {
    %c0_i32 = arith.constant 0 : i32
    %c0_i32_0 = arith.constant 0 : i32
    return %c0_i32, %arg1 : i32, i32
  }
  func.func @transform_3(%arg0: i32, %arg1: i32, %arg2: i32) -> (i32, i32) {
    %c0_i32 = arith.constant 0 : i32
    %c0_i32_0 = arith.constant 0 : i32
    return %c0_i32, %arg1 : i32, i32
  }
  func.func @transform_4(%arg0: i32, %arg1: i32, %arg2: i32) -> (i32, i32) {
    %c0_i32 = arith.constant 0 : i32
    return %arg0, %arg1 : i32, i32
  }
}

</mosaic_0001>

<llo_original>
// kernel: tpu_custom_call.1
$region0: #{tpu_custom_call.1}
  #allocation0 [shape = 'u32[]', space=smem, size = 0x4, offset = 0x4, fixed_abs, tag = 'smem constant byte address 0x4 - core index']
  #allocation1 [shape = 'u32[144,128]{1,0:T(1,128)}', space=vmem, size = 0x12000, scoped, tag = 'internal scratch']
  #allocation2 [shape = 'f32[256,128]{1,0:T(8,128)}', space=vmem, size = 0x20000, scoped, tag = 'scratch operand']
  %s0 = inlined_call_operand.hbm [shape: bf16[512,128], index: 0, kind: input, shape index: {}]
  %s1 = inlined_call_operand.hbm [shape: bf16[128,128], index: 1, kind: input, shape index: {}]
  %s2 = inlined_call_operand.vmem [shape: f32[1,128], index: 2, kind: input, shape index: {}]
  %s3 = inlined_call_operand.vmem [shape: f32[1,128], index: 3, kind: input, shape index: {}]
  %s4 = inlined_call_operand.hbm [shape: bf16[512,128], index: 4, kind: output, shape index: {}]
  %s5 = sld [smem:[#allocation0]]
  $region65: #{tpu_custom_call.1} parent=0
    _
  %s7 = ssub.s32 1, %s5
  %s8 = scalar_select 0, %s7, %s5
  $region1: #{tpu_custom_call.1} parent=0
    #allocation3 [shape = 'u8[131072]{0}', space=vmem, size = 0x20000, scoped, tag = 'input window, operand 0']
    #allocation4 [shape = 's32[2]{0}', space=sflag, size = 0x8, scoped, tag = 'scoped memory for tpu_custom_call.1']
    #allocation5 [shape = 's32[2]{0}', space=sflag, size = 0x8, scoped, tag = 'scoped memory for tpu_custom_call.1']
    #allocation6 [shape = 'u8[32768]{0}', space=vmem, size = 0x8000, scoped, tag = 'input window, operand 1, single buffered']
    #allocation7 [shape = 's32[1]{0}', space=sflag, size = 0x4, scoped, tag = 'scoped memory for tpu_custom_call.1']
    #allocation8 [shape = 'u8[131072]{0}', space=vmem, size = 0x20000, scoped, tag = 'output window, operand 0']
    %9 = vsyncpa [#allocation4], 0
    %s10 = scalar_lea.sflag [#allocation4], 1
    %11 = vsyncpa %s10, 0
    %12 = vsyncpa [#allocation7], 0
    %13 = vsyncpa [#allocation5], 0
    %s14 = scalar_lea.sflag [#allocation5], 1
    %15 = vsyncpa %s14, 0
    loop: start=0, step=1, limit=4
    $region2: #{tpu_custom_call.1} parent=1 // loop_pre_header
      _
    $region3: #{tpu_custom_call.1} parent=1 // loop_header
      %s17 = sphi 0, %s21
      %p18 = scmp.ge.s32.totalorder %s17, 4
      %s24 = sphi 0, %s43
      %s25 = sphi 0, %s39
      %s26 = sphi 0, %s35
      %s27 = sphi 0, %s24
      %s28 = sphi 0, %s25
      %s29 = sphi 0, %s26
      %s30 = sphi 0, %s27
      %s31 = sphi 0, %s28
      %s32 = sphi 0, %s29
      %s48 = sphi 0, %s50
      %s51 = sphi 0, %s48
      %s52 = sphi 0, %s51
      %s68 = sphi 0, %s52
      %s76 = sphi 0, %s78
      %s79 = sphi 0, %s76
      %s80 = sphi 0, %s79
      %s96 = sphi 0, %s80
      %s102 = sphi 0, %s104
      %s105 = sphi 0, %s102
      %s106 = sphi 0, %s105
      %s122 = sphi 0, %s106
      %s128 = sphi 0, %s130
      %s131 = sphi 0, %s128
      %s132 = sphi 0, %s131
      %s148 = sphi 0, %s132
      %s156 = sphi 0, %s158
      %s159 = sphi 0, %s156
      %s160 = sphi 0, %s159
      %s176 = sphi 0, %s160
    $region4: #{tpu_custom_call.1} parent=1 // loop_header_branch
      %20 = sbr.rel (%p18) target = $region8
    $region5: #{tpu_custom_call.1} parent=1 // loop_body
      %s22 = ssub.s32 %s17, 1
      %s23 = ssub.s32 %s17, 2
      %s33 = sadd.s32 1, %s26
      %p34 = scmp.ge.s32.totalorder %s33, 1
      %s35 = scalar_select %p34, 0, %s33
      %s36 = sadd.s32 1, %s25
      %s37 = scalar_select %p34, %s36, %s25
      %p38 = scmp.ge.s32.totalorder %s37, 1
      %s39 = scalar_select %p38, 0, %s37
      %s40 = sadd.s32 1, %s24
      %s41 = scalar_select %p38, %s40, %s24
      %p42 = scmp.ge.s32.totalorder %s41, 2
      %s43 = scalar_select %p42, 0, %s41
      %s44 = ssub.s32 %s24, %s43
      %s45 = ssub.s32 %s26, %s35
      %s46 = sor.u32 %s44, %s45
      %p47 = scmp.eq.s32.totalorder %s46, 0
      %s49 = sadd.s32 %s48, 1
      %s50 = scalar_select %p47, %s48, %s49
      %p53 = pneg %p47
      %p54 = scmp.eq.s32.totalorder %s17, 1
      %p55 = por %p53, %p54
      %p56 = scmp.ne.s32.totalorder %s48, %s51
      %p57 = scmp.eq.s32.totalorder %s17, 0
      %p58 = por %p56, %p57
      %p59 = scmp.ne.s32.totalorder %s48, %s51
      %p60 = scmp.eq.s32.totalorder %s22, 1
      %p61 = por %p59, %p60
      %p62 = scmp.ne.s32.totalorder %s51, %s52
      %p63 = scmp.eq.s32.totalorder %s22, 0
      %p64 = por %p62, %p63
      %p65 = scmp.ne.s32.totalorder %s51, %s52
      %p66 = scmp.eq.s32.totalorder %s23, 1
      %p67 = por %p65, %p66
      %p69 = scmp.ne.s32.totalorder %s52, %s68
      %p70 = scmp.eq.s32.totalorder %s23, 0
      %p71 = por %p69, %p70
      %s72 = ssub.s32 %s26, %s35
      %s73 = ssub.s32 %s25, %s39
      %s74 = sor.u32 %s72, %s73
      %p75 = scmp.eq.s32.totalorder %s74, 0
      %s77 = sadd.s32 %s76, 1
      %s78 = scalar_select %p75, %s76, %s77
      %p81 = pneg %p75
      %p82 = scmp.eq.s32.totalorder %s17, 1
      %p83 = por %p81, %p82
      %p84 = scmp.ne.s32.totalorder %s76, %s79
      %p85 = scmp.eq.s32.totalorder %s17, 0
      %p86 = por %p84, %p85
      %p87 = scmp.ne.s32.totalorder %s76, %s79
      %p88 = scmp.eq.s32.totalorder %s22, 1
      %p89 = por %p87, %p88
      %p90 = scmp.ne.s32.totalorder %s79, %s80
      %p91 = scmp.eq.s32.totalorder %s22, 0
      %p92 = por %p90, %p91
      %p93 = scmp.ne.s32.totalorder %s79, %s80
      %p94 = scmp.eq.s32.totalorder %s23, 1
      %p95 = por %p93, %p94
      %p97 = scmp.ne.s32.totalorder %s80, %s96
      %p98 = scmp.eq.s32.totalorder %s23, 0
      %p99 = por %p97, %p98
      %s100 = ssub.s32 %s25, %s39
      %p101 = scmp.eq.s32.totalorder %s100, 0
      %s103 = sadd.s32 %s102, 1
      %s104 = scalar_select %p101, %s102, %s103
      %p107 = pneg %p101
      %p108 = scmp.eq.s32.totalorder %s17, 1
      %p109 = por %p107, %p108
      %p110 = scmp.ne.s32.totalorder %s102, %s105
      %p111 = scmp.eq.s32.totalorder %s17, 0
      %p112 = por %p110, %p111
      %p113 = scmp.ne.s32.totalorder %s102, %s105
      %p114 = scmp.eq.s32.totalorder %s22, 1
      %p115 = por %p113, %p114
      %p116 = scmp.ne.s32.totalorder %s105, %s106
      %p117 = scmp.eq.s32.totalorder %s22, 0
      %p118 = por %p116, %p117
      %p119 = scmp.ne.s32.totalorder %s105, %s106
      %p120 = scmp.eq.s32.totalorder %s23, 1
      %p121 = por %p119, %p120
      %p123 = scmp.ne.s32.totalorder %s106, %s122
      %p124 = scmp.eq.s32.totalorder %s23, 0
      %p125 = por %p123, %p124
      %s126 = ssub.s32 %s25, %s39
      %p127 = scmp.eq.s32.totalorder %s126, 0
      %s129 = sadd.s32 %s128, 1
      %s130 = scalar_select %p127, %s128, %s129
      %p133 = pneg %p127
      %p134 = scmp.eq.s32.totalorder %s17, 1
      %p135 = por %p133, %p134
      %p136 = scmp.ne.s32.totalorder %s128, %s131
      %p137 = scmp.eq.s32.totalorder %s17, 0
      %p138 = por %p136, %p137
      %p139 = scmp.ne.s32.totalorder %s128, %s131
      %p140 = scmp.eq.s32.totalorder %s22, 1
      %p141 = por %p139, %p140
      %p142 = scmp.ne.s32.totalorder %s131, %s132
      %p143 = scmp.eq.s32.totalorder %s22, 0
      %p144 = por %p142, %p143
      %p145 = scmp.ne.s32.totalorder %s131, %s132
      %p146 = scmp.eq.s32.totalorder %s23, 1
      %p147 = por %p145, %p146
      %p149 = scmp.ne.s32.totalorder %s132, %s148
      %p150 = scmp.eq.s32.totalorder %s23, 0
      %p151 = por %p149, %p150
      %s152 = ssub.s32 %s24, %s43
      %s153 = ssub.s32 %s25, %s39
      %s154 = sor.u32 %s152, %s153
      %p155 = scmp.eq.s32.totalorder %s154, 0
      %s157 = sadd.s32 %s156, 1
      %s158 = scalar_select %p155, %s156, %s157
      %p161 = pneg %p155
      %p162 = scmp.eq.s32.totalorder %s17, 1
      %p163 = por %p161, %p162
      %p164 = scmp.ne.s32.totalorder %s156, %s159
      %p165 = scmp.eq.s32.totalorder %s17, 0
      %p166 = por %p164, %p165
      %p167 = scmp.ne.s32.totalorder %s156, %s159
      %p168 = scmp.eq.s32.totalorder %s22, 1
      %p169 = por %p167, %p168
      %p170 = scmp.ne.s32.totalorder %s159, %s160
      %p171 = scmp.eq.s32.totalorder %s22, 0
      %p172 = por %p170, %p171
      %p173 = scmp.ne.s32.totalorder %s159, %s160
      %p174 = scmp.eq.s32.totalorder %s23, 1
      %p175 = por %p173, %p174
      %p177 = scmp.ne.s32.totalorder %s160, %s176
      %p178 = scmp.eq.s32.totalorder %s23, 0
      %p179 = por %p177, %p178
      %p180 = scmp.le.s32.totalorder 1, %s17
      %p181 = scmp.lt.s32.totalorder %s17, 3
      %p182 = pnand %p180, %p181
      %p183 = pneg %p182
      // Predicated region
      $region9: #{tpu_custom_call.1} parent=5 // pred_check
        _
      $region10: #{tpu_custom_call.1} parent=5 // pred_check_branch
        %185 = sbr.rel (%p182) target = $region12
      $region11: #{tpu_custom_call.1} parent=5 // pred_region
        %s186 = ssub.s32 %s17, 1
        // Predicated region
        $region13: #{tpu_custom_call.1} parent=11 // pred_check
          %p187 = pneg %p92
        $region14: #{tpu_custom_call.1} parent=11 // pred_check_branch
          %189 = sbr.rel (%p187) target = $region16
        $region15: #{tpu_custom_call.1} parent=11 // pred_region
          %s190 = smul.u32 16, %s29
          %s192 = ssub.s32 1024, 1024
          %193 = vsyncadd [#allocation7], %s192
          %s194 = sadd.s32 %s28, %s190
          %s195 = smul.addr %s194, 64
          %s196 = scalar_lea.hbm %s1, %s195
          %s197 = sshll.u32 [#allocation6], 4
          %s198 = int_to_ptr.vmem [resolvable:$true] %s197
          %203 = dma.hbm_to_vmem [thread:$0]  %s196, 1024, %s198, [#allocation7], 64, 64, 4
        $region16: #{tpu_custom_call.1} parent=11 // pred_fallthru
          _
        // Predicated region
        $region17: #{tpu_custom_call.1} parent=11 // pred_check
          %p204 = pneg %p118
        $region18: #{tpu_custom_call.1} parent=11 // pred_check_branch
          %206 = sbr.rel (%p204) target = $region20
        $region19: #{tpu_custom_call.1} parent=11 // pred_region
          %p207 = scmp.lt.s32.totalorder %s28, 0
          %s208 = scalar_select %p207, %s28, 0
          %s209 = scalar_lea.vmem %s2, %s208
        $region20: #{tpu_custom_call.1} parent=11 // pred_fallthru
          _
        // Predicated region
        $region21: #{tpu_custom_call.1} parent=11 // pred_check
          %p210 = pneg %p144
        $region22: #{tpu_custom_call.1} parent=11 // pred_check_branch
          %212 = sbr.rel (%p210) target = $region24
        $region23: #{tpu_custom_call.1} parent=11 // pred_region
          %p213 = scmp.lt.s32.totalorder %s28, 0
          %s214 = scalar_select %p213, %s28, 0
          %s215 = scalar_lea.vmem %s3, %s214
        $region24: #{tpu_custom_call.1} parent=11 // pred_fallthru
          _
      $region12: #{tpu_custom_call.1} parent=5 // pred_fallthru
        _
      %p216 = scmp.lt.s32.totalorder %s17, 2
      // Predicated region
      $region25: #{tpu_custom_call.1} parent=5 // pred_check
        %p217 = pneg %p216
      $region26: #{tpu_custom_call.1} parent=5 // pred_check_branch
        %219 = sbr.rel (%p217) target = $region28
      $region27: #{tpu_custom_call.1} parent=5 // pred_region
        // Predicated region
        $region29: #{tpu_custom_call.1} parent=27 // pred_check
          %p220 = pneg %p58
        $region30: #{tpu_custom_call.1} parent=27 // pred_check_branch
          %222 = sbr.rel (%p220) target = $region32
        $region31: #{tpu_custom_call.1} parent=27 // pred_region
          %s223 = sand.u32 %s48, 1
          %s224 = scalar_lea.sflag [#allocation4], %s223
          %s225 = sand.u32 %s48, 1
          %s226 = smul.addr %s225, 128
          %s227 = scalar_lea.vmem [#allocation3], %s226
          %s228 = smul.u32 32, %s24
          %s230 = ssub.s32 2048, 2048
          %231 = vsyncadd %s224, %s230
          %s232 = sadd.s32 %s26, %s228
          %s233 = smul.addr %s232, 64
          %s234 = scalar_lea.hbm %s0, %s233
          %s235 = sshll.u32 %s227, 4
          %s236 = int_to_ptr.vmem [resolvable:$true] %s235
          %241 = dma.hbm_to_vmem [thread:$0]  %s234, 2048, %s236, %s224, 64, 64, 4
        $region32: #{tpu_custom_call.1} parent=27 // pred_fallthru
          _
      $region28: #{tpu_custom_call.1} parent=5 // pred_fallthru
        _
      %p242 = scmp.le.s32.totalorder 1, %s17
      %p243 = scmp.lt.s32.totalorder %s17, 3
      %p244 = pnand %p242, %p243
      %p245 = pneg %p244
      // Predicated region
      $region33: #{tpu_custom_call.1} parent=5 // pred_check
        _
      $region34: #{tpu_custom_call.1} parent=5 // pred_check_branch
        %247 = sbr.rel (%p244) target = $region36
      $region35: #{tpu_custom_call.1} parent=5 // pred_region
        %s248 = ssub.s32 %s17, 1
        %s249 = sand.u32 %s51, 1
        %s250 = scalar_lea.sflag [#allocation4], %s249
        %s251 = sand.u32 %s51, 1
        %s252 = smul.addr %s251, 128
        %s253 = scalar_lea.vmem [#allocation3], %s252
        // Predicated region
        $region37: #{tpu_custom_call.1} parent=35 // pred_check
          %p254 = pneg %p64
        $region38: #{tpu_custom_call.1} parent=35 // pred_check_branch
          %256 = sbr.rel (%p254) target = $region40
        $region39: #{tpu_custom_call.1} parent=35 // pred_region
          %257 = dma.done %s250, 2048
        $region40: #{tpu_custom_call.1} parent=35 // pred_fallthru
          _
        // Predicated region
        $region41: #{tpu_custom_call.1} parent=35 // pred_check
          %p258 = pneg %p92
        $region42: #{tpu_custom_call.1} parent=35 // pred_check_branch
          %260 = sbr.rel (%p258) target = $region44
        $region43: #{tpu_custom_call.1} parent=35 // pred_region
          %261 = dma.done [#allocation7], 1024
        $region44: #{tpu_custom_call.1} parent=35 // pred_fallthru
          _
        %s262 = sand.u32 %s51, 1
        %s263 = scalar_lea.sflag [#allocation4], %s262
        %s264 = sand.u32 %s51, 1
        %s265 = smul.addr %s264, 128
        %s266 = scalar_lea.vmem [#allocation3], %s265
        %p267 = pneg %p64
        %p268 = pneg %p61
        %p269 = pneg %p92
        %p270 = pneg %p89
        %p271 = scmp.lt.s32.totalorder %s28, 0
        %s272 = scalar_select %p271, %s28, 0
        %s273 = scalar_lea.vmem %s2, %s272
        %p274 = pneg %p118
        %p275 = pneg %p115
        %p276 = scmp.lt.s32.totalorder %s28, 0
        %s277 = scalar_select %p276, %s28, 0
        %s278 = scalar_lea.vmem %s3, %s277
        %p279 = pneg %p144
        %p280 = pneg %p141
        %p281 = pneg %p172
        %p282 = pneg %p169
        %s283 = sand.u32 %s159, 1
        %s284 = scalar_lea.sflag [#allocation5], %s283
        %s285 = sand.u32 %s159, 1
        %s286 = smul.addr %s285, 128
        %s287 = scalar_lea.vmem [#allocation8], %s286
        %s288 = smul.u32 32, %s27
        %s289 = smul.u32 16, %s29
        %p290 = scmp.lt.s32.totalorder %s28, 0
        %s291 = scalar_select %p290, %s28, 0
        %s292 = scalar_lea.vmem %s2, %s291
        %p293 = scmp.lt.s32.totalorder %s28, 0
        %s294 = scalar_select %p293, %s28, 0
        %s295 = scalar_lea.vmem %s3, %s294
        %s296 = smul.u32 32, %s27
        %p298 = scmp.eq.s32.totalorder %s29, 0
        // Predicated region
        $region45: #{tpu_custom_call.1} parent=35 // pred_check
          %p299 = pneg %p298
        $region46: #{tpu_custom_call.1} parent=35 // pred_check_branch
          %301 = sbr.rel (%p299) target = $region48
        $region47: #{tpu_custom_call.1} parent=35 // pred_region
          %302 = vst [vmem:[#allocation2] sm:$0xff] 0.0
          %303 = vst [vmem:[#allocation2 + $0x8] sm:$0xff] 0.0
          %304 = vst [vmem:[#allocation2 + $0x10] sm:$0xff] 0.0
          %305 = vst [vmem:[#allocation2 + $0x18] sm:$0xff] 0.0
          %306 = vst [vmem:[#allocation2 + $0x20] sm:$0xff] 0.0
          %307 = vst [vmem:[#allocation2 + $0x28] sm:$0xff] 0.0
          %308 = vst [vmem:[#allocation2 + $0x30] sm:$0xff] 0.0
          %309 = vst [vmem:[#allocation2 + $0x38] sm:$0xff] 0.0
          %310 = vst [vmem:[#allocation2 + $0x40] sm:$0xff] 0.0
          %311 = vst [vmem:[#allocation2 + $0x48] sm:$0xff] 0.0
          %312 = vst [vmem:[#allocation2 + $0x50] sm:$0xff] 0.0
          %313 = vst [vmem:[#allocation2 + $0x58] sm:$0xff] 0.0
          %314 = vst [vmem:[#allocation2 + $0x60] sm:$0xff] 0.0
          %315 = vst [vmem:[#allocation2 + $0x68] sm:$0xff] 0.0
          %316 = vst [vmem:[#allocation2 + $0x70] sm:$0xff] 0.0
          %317 = vst [vmem:[#allocation2 + $0x78] sm:$0xff] 0.0
          %318 = vst [vmem:[#allocation2 + $0x80] sm:$0xff] 0.0
          %319 = vst [vmem:[#allocation2 + $0x88] sm:$0xff] 0.0
          %320 = vst [vmem:[#allocation2 + $0x90] sm:$0xff] 0.0
          %321 = vst [vmem:[#allocation2 + $0x98] sm:$0xff] 0.0
          %322 = vst [vmem:[#allocation2 + $0xa0] sm:$0xff] 0.0
          %323 = vst [vmem:[#allocation2 + $0xa8] sm:$0xff] 0.0
          %324 = vst [vmem:[#allocation2 + $0xb0] sm:$0xff] 0.0
          %325 = vst [vmem:[#allocation2 + $0xb8] sm:$0xff] 0.0
          %326 = vst [vmem:[#allocation2 + $0xc0] sm:$0xff] 0.0
          %327 = vst [vmem:[#allocation2 + $0xc8] sm:$0xff] 0.0
          %328 = vst [vmem:[#allocation2 + $0xd0] sm:$0xff] 0.0
          %329 = vst [vmem:[#allocation2 + $0xd8] sm:$0xff] 0.0
          %330 = vst [vmem:[#allocation2 + $0xe0] sm:$0xff] 0.0
          %331 = vst [vmem:[#allocation2 + $0xe8] sm:$0xff] 0.0
          %332 = vst [vmem:[#allocation2 + $0xf0] sm:$0xff] 0.0
          %333 = vst [vmem:[#allocation2 + $0xf8] sm:$0xff] 0.0
        $region48: #{tpu_custom_call.1} parent=35 // pred_fallthru
          _
        %v334 = vld [vmem:[%s253] sm:$0xf]
        %v335 = vld [vmem:[%s253 + $0x4] sm:$0xf]
        %v336 = vld [vmem:[%s253 + $0x8] sm:$0xf]
        %v337 = vld [vmem:[%s253 + $0xc] sm:$0xf]
        %v338 = vld [vmem:[%s253 + $0x10] sm:$0xf]
        %v339 = vld [vmem:[%s253 + $0x14] sm:$0xf]
        %v340 = vld [vmem:[%s253 + $0x18] sm:$0xf]
        %v341 = vld [vmem:[%s253 + $0x1c] sm:$0xf]
        %v342 = vld [vmem:[%s253 + $0x20] sm:$0xf]
        %v343 = vld [vmem:[%s253 + $0x24] sm:$0xf]
        %v344 = vld [vmem:[%s253 + $0x28] sm:$0xf]
        %v345 = vld [vmem:[%s253 + $0x2c] sm:$0xf]
        %v346 = vld [vmem:[%s253 + $0x30] sm:$0xf]
        %v347 = vld [vmem:[%s253 + $0x34] sm:$0xf]
        %v348 = vld [vmem:[%s253 + $0x38] sm:$0xf]
        %v349 = vld [vmem:[%s253 + $0x3c] sm:$0xf]
        %v350 = vld [vmem:[%s253 + $0x40] sm:$0xf]
        %v351 = vld [vmem:[%s253 + $0x44] sm:$0xf]
        %v352 = vld [vmem:[%s253 + $0x48] sm:$0xf]
        %v353 = vld [vmem:[%s253 + $0x4c] sm:$0xf]
        %v354 = vld [vmem:[%s253 + $0x50] sm:$0xf]
        %v355 = vld [vmem:[%s253 + $0x54] sm:$0xf]
        %v356 = vld [vmem:[%s253 + $0x58] sm:$0xf]
        %v357 = vld [vmem:[%s253 + $0x5c] sm:$0xf]
        %v358 = vld [vmem:[%s253 + $0x60] sm:$0xf]
        %v359 = vld [vmem:[%s253 + $0x64] sm:$0xf]
        %v360 = vld [vmem:[%s253 + $0x68] sm:$0xf]
        %v361 = vld [vmem:[%s253 + $0x6c] sm:$0xf]
        %v362 = vld [vmem:[%s253 + $0x70] sm:$0xf]
        %v363 = vld [vmem:[%s253 + $0x74] sm:$0xf]
        %v364 = vld [vmem:[%s253 + $0x78] sm:$0xf]
        %v365 = vld [vmem:[%s253 + $0x7c] sm:$0xf]
        %v366 = vld [vmem:[#allocation2] sm:$0xff]
        %v367 = vld [vmem:[#allocation2 + $0x8] sm:$0xff]
        %v368 = vld [vmem:[#allocation2 + $0x10] sm:$0xff]
        %v369 = vld [vmem:[#allocation2 + $0x18] sm:$0xff]
        %v370 = vld [vmem:[#allocation2 + $0x20] sm:$0xff]
        %v371 = vld [vmem:[#allocation2 + $0x28] sm:$0xff]
        %v372 = vld [vmem:[#allocation2 + $0x30] sm:$0xff]
        %v373 = vld [vmem:[#allocation2 + $0x38] sm:$0xff]
        %v374 = vld [vmem:[#allocation2 + $0x40] sm:$0xff]
        %v375 = vld [vmem:[#allocation2 + $0x48] sm:$0xff]
        %v376 = vld [vmem:[#allocation2 + $0x50] sm:$0xff]
        %v377 = vld [vmem:[#allocation2 + $0x58] sm:$0xff]
        %v378 = vld [vmem:[#allocation2 + $0x60] sm:$0xff]
        %v379 = vld [vmem:[#allocation2 + $0x68] sm:$0xff]
        %v380 = vld [vmem:[#allocation2 + $0x70] sm:$0xff]
        %v381 = vld [vmem:[#allocation2 + $0x78] sm:$0xff]
        %v382 = vld [vmem:[#allocation2 + $0x80] sm:$0xff]
        %v383 = vld [vmem:[#allocation2 + $0x88] sm:$0xff]
        %v384 = vld [vmem:[#allocation2 + $0x90] sm:$0xff]
        %v385 = vld [vmem:[#allocation2 + $0x98] sm:$0xff]
        %v386 = vld [vmem:[#allocation2 + $0xa0] sm:$0xff]
        %v387 = vld [vmem:[#allocation2 + $0xa8] sm:$0xff]
        %v388 = vld [vmem:[#allocation2 + $0xb0] sm:$0xff]
        %v389 = vld [vmem:[#allocation2 + $0xb8] sm:$0xff]
        %v390 = vld [vmem:[#allocation2 + $0xc0] sm:$0xff]
        %v391 = vld [vmem:[#allocation2 + $0xc8] sm:$0xff]
        %v392 = vld [vmem:[#allocation2 + $0xd0] sm:$0xff]
        %v393 = vld [vmem:[#allocation2 + $0xd8] sm:$0xff]
        %v394 = vld [vmem:[#allocation2 + $0xe0] sm:$0xff]
        %v395 = vld [vmem:[#allocation2 + $0xe8] sm:$0xff]
        %v396 = vld [vmem:[#allocation2 + $0xf0] sm:$0xff]
        %v397 = vld [vmem:[#allocation2 + $0xf8] sm:$0xff]
        %v398 = vld [vmem:[#allocation6] sm:$0xf]
        %v399 = vld [vmem:[#allocation6 + $0x4] sm:$0xf]
        %v400 = vld [vmem:[#allocation6 + $0x8] sm:$0xf]
        %v401 = vld [vmem:[#allocation6 + $0xc] sm:$0xf]
        %v402 = vld [vmem:[#allocation6 + $0x10] sm:$0xf]
        %v403 = vld [vmem:[#allocation6 + $0x14] sm:$0xf]
        %v404 = vld [vmem:[#allocation6 + $0x18] sm:$0xf]
        %v405 = vld [vmem:[#allocation6 + $0x1c] sm:$0xf]
        %v406 = vld [vmem:[#allocation6 + $0x20] sm:$0xf]
        %v407 = vld [vmem:[#allocation6 + $0x24] sm:$0xf]
        %v408 = vld [vmem:[#allocation6 + $0x28] sm:$0xf]
        %v409 = vld [vmem:[#allocation6 + $0x2c] sm:$0xf]
        %v410 = vld [vmem:[#allocation6 + $0x30] sm:$0xf]
        %v411 = vld [vmem:[#allocation6 + $0x34] sm:$0xf]
        %v412 = vld [vmem:[#allocation6 + $0x38] sm:$0xf]
        %v413 = vld [vmem:[#allocation6 + $0x3c] sm:$0xf]
        %v446 = vunpack.c.l.b16 %v334
        %v447 = vunpack.c.l.b16 %v335
        %v448 = vunpack.c.l.b16 %v336
        %v449 = vunpack.c.l.b16 %v337
        %v450 = vunpack.c.l.b16 %v338
        %v451 = vunpack.c.l.b16 %v339
        %v452 = vunpack.c.l.b16 %v340
        %v453 = vunpack.c.l.b16 %v341
        %v454 = vunpack.c.l.b16 %v342
        %v455 = vunpack.c.l.b16 %v343
        %v456 = vunpack.c.l.b16 %v344
        %v457 = vunpack.c.l.b16 %v345
        %v458 = vunpack.c.l.b16 %v346
        %v459 = vunpack.c.l.b16 %v347
        %v460 = vunpack.c.l.b16 %v348
        %v461 = vunpack.c.l.b16 %v349
        %v462 = vunpack.c.l.b16 %v350
        %v463 = vunpack.c.l.b16 %v351
        %v464 = vunpack.c.l.b16 %v352
        %v465 = vunpack.c.l.b16 %v353
        %v466 = vunpack.c.l.b16 %v354
        %v467 = vunpack.c.l.b16 %v355
        %v468 = vunpack.c.l.b16 %v356
        %v469 = vunpack.c.l.b16 %v357
        %v470 = vunpack.c.l.b16 %v358
        %v471 = vunpack.c.l.b16 %v359
        %v472 = vunpack.c.l.b16 %v360
        %v473 = vunpack.c.l.b16 %v361
        %v474 = vunpack.c.l.b16 %v362
        %v475 = vunpack.c.l.b16 %v363
        %v476 = vunpack.c.l.b16 %v364
        %v477 = vunpack.c.l.b16 %v365
        %v478 = vpack.c.b16 %v447, %v446
        %v479 = vpack.c.b16 %v449, %v448
        %v480 = vpack.c.b16 %v451, %v450
        %v481 = vpack.c.b16 %v453, %v452
        %v482 = vpack.c.b16 %v455, %v454
        %v483 = vpack.c.b16 %v457, %v456
        %v484 = vpack.c.b16 %v459, %v458
        %v485 = vpack.c.b16 %v461, %v460
        %v486 = vpack.c.b16 %v463, %v462
        %v487 = vpack.c.b16 %v465, %v464
        %v488 = vpack.c.b16 %v467, %v466
        %v489 = vpack.c.b16 %v469, %v468
        %v490 = vpack.c.b16 %v471, %v470
        %v491 = vpack.c.b16 %v473, %v472
        %v492 = vpack.c.b16 %v475, %v474
        %v493 = vpack.c.b16 %v477, %v476
        %v526 = vunpack.c.l.b16 %v398
        %v527 = vunpack.c.l.b16 %v399
        %v528 = vunpack.c.l.b16 %v400
        %v529 = vunpack.c.l.b16 %v401
        %v530 = vunpack.c.l.b16 %v402
        %v531 = vunpack.c.l.b16 %v403
        %v532 = vunpack.c.l.b16 %v404
        %v533 = vunpack.c.l.b16 %v405
        %v534 = vunpack.c.l.b16 %v406
        %v535 = vunpack.c.l.b16 %v407
        %v536 = vunpack.c.l.b16 %v408
        %v537 = vunpack.c.l.b16 %v409
        %v538 = vunpack.c.l.b16 %v410
        %v539 = vunpack.c.l.b16 %v411
        %v540 = vunpack.c.l.b16 %v412
        %v541 = vunpack.c.l.b16 %v413
        %v542 = vpack.c.b16 %v527, %v526
        %v543 = vpack.c.b16 %v529, %v528
        %v544 = vpack.c.b16 %v531, %v530
        %v545 = vpack.c.b16 %v533, %v532
        %v546 = vpack.c.b16 %v535, %v534
        %v547 = vpack.c.b16 %v537, %v536
        %v548 = vpack.c.b16 %v539, %v538
        %v549 = vpack.c.b16 %v541, %v540
        %558 = vmatprep.subr.bf16.mxu0 0
        %559 = vmatpush1.bf16.msra.mxu0 %v542
        %560 = vmatprep.subr.bf16.mxu0 0
        %561 = vmatpush1.bf16.msra.mxu0 %v543
        %562 = vmatprep.subr.bf16.mxu0 0
        %563 = vmatpush1.bf16.msra.mxu0 %v544
        %564 = vmatprep.subr.bf16.mxu0 0
        %565 = vmatpush1.bf16.msra.mxu0 %v545
        %566 = vmatprep.subr.bf16.mxu0 0
        %567 = vmatpush1.bf16.msra.mxu0 %v546
        %568 = vmatprep.subr.bf16.mxu0 0
        %569 = vmatpush1.bf16.msra.mxu0 %v547
        %570 = vmatprep.subr.bf16.mxu0 0
        %571 = vmatpush1.bf16.msra.mxu0 %v548
        %572 = vmatprep.subr.bf16.mxu0 0
        %573 = vmatpush1.bf16.msra.mxu0 %v549
        %574 = vmatprep.subr.bf16.mxu0 0
        %575 = vmatpush1.bf16.msra.mxu0 0
        %576 = vmatprep.subr.bf16.mxu0 0
        %577 = vmatpush1.bf16.msra.mxu0 0
        %578 = vmatprep.subr.bf16.mxu0 0
        %579 = vmatpush1.bf16.msra.mxu0 0
        %580 = vmatprep.subr.bf16.mxu0 0
        %581 = vmatpush1.bf16.msra.mxu0 0
        %582 = vmatprep.subr.bf16.mxu0 0
        %583 = vmatpush1.bf16.msra.mxu0 0
        %584 = vmatprep.subr.bf16.mxu0 0
        %585 = vmatpush1.bf16.msra.mxu0 0
        %586 = vmatprep.subr.bf16.mxu0 0
        %587 = vmatpush1.bf16.msra.mxu0 0
        %588 = vmatprep.subr.bf16.mxu0 0
        %589 = vmatpush1.bf16.msra.mxu0 0
        %590 = vmatprep.mubr.bf16.mxu0 0
        %591 = vmatmul.mubr.bf16.gmra.mrb[0].mxu0 %v478
        %v592 = vpop.f32.mrb[0].mxu0
        %v593 = vadd.f32 0.0, %v592
        %v594 = vpop.f32.mrb[0].mxu0
        %v595 = vpop.f32.mrb[0].mxu0
        %v596 = vadd.f32 0.0, %v595
        %v597 = vpop.f32.mrb[0].mxu0
        %598 = vmatprep.mubr.bf16.mxu0 0
        %599 = vmatmul.mubr.bf16.gmra.mrb[0].mxu0 %v479
        %v600 = vpop.f32.mrb[0].mxu0
        %v601 = vadd.f32 0.0, %v600
        %v602 = vpop.f32.mrb[0].mxu0
        %v603 = vpop.f32.mrb[0].mxu0
        %v604 = vadd.f32 0.0, %v603
        %v605 = vpop.f32.mrb[0].mxu0
        %606 = vmatprep.mubr.bf16.mxu0 0
        %607 = vmatmul.mubr.bf16.gmra.mrb[0].mxu0 %v480
        %v608 = vpop.f32.mrb[0].mxu0
        %v609 = vadd.f32 0.0, %v608
        %v610 = vpop.f32.mrb[0].mxu0
        %v611 = vpop.f32.mrb[0].mxu0
        %v612 = vadd.f32 0.0, %v611
        %v613 = vpop.f32.mrb[0].mxu0
        %614 = vmatprep.mubr.bf16.mxu0 0
        %615 = vmatmul.mubr.bf16.gmra.mrb[0].mxu0 %v481
        %v616 = vpop.f32.mrb[0].mxu0
        %v617 = vadd.f32 0.0, %v616
        %v618 = vpop.f32.mrb[0].mxu0
        %v619 = vpop.f32.mrb[0].mxu0
        %v620 = vadd.f32 0.0, %v619
        %v621 = vpop.f32.mrb[0].mxu0
        %622 = vmatprep.mubr.bf16.mxu0 0
        %623 = vmatmul.mubr.bf16.gmra.mrb[0].mxu0 %v482
        %v624 = vpop.f32.mrb[0].mxu0
        %v625 = vadd.f32 0.0, %v624
        %v626 = vpop.f32.mrb[0].mxu0
        %v627 = vpop.f32.mrb[0].mxu0
        %v628 = vadd.f32 0.0, %v627
        %v629 = vpop.f32.mrb[0].mxu0
        %630 = vmatprep.mubr.bf16.mxu0 0
        %631 = vmatmul.mubr.bf16.gmra.mrb[0].mxu0 %v483
        %v632 = vpop.f32.mrb[0].mxu0
        %v633 = vadd.f32 0.0, %v632
        %v634 = vpop.f32.mrb[0].mxu0
        %v635 = vpop.f32.mrb[0].mxu0
        %v636 = vadd.f32 0.0, %v635
        %v637 = vpop.f32.mrb[0].mxu0
        %638 = vmatprep.mubr.bf16.mxu0 0
        %639 = vmatmul.mubr.bf16.gmra.mrb[0].mxu0 %v484
        %v640 = vpop.f32.mrb[0].mxu0
        %v641 = vadd.f32 0.0, %v640
        %v642 = vpop.f32.mrb[0].mxu0
        %v643 = vpop.f32.mrb[0].mxu0
        %v644 = vadd.f32 0.0, %v643
        %v645 = vpop.f32.mrb[0].mxu0
        %646 = vmatprep.mubr.bf16.mxu0 0
        %647 = vmatmul.mubr.bf16.gmra.mrb[0].mxu0 %v485
        %v648 = vpop.f32.mrb[0].mxu0
        %v649 = vadd.f32 0.0, %v648
        %v650 = vpop.f32.mrb[0].mxu0
        %v651 = vpop.f32.mrb[0].mxu0
        %v652 = vadd.f32 0.0, %v651
        %v653 = vpop.f32.mrb[0].mxu0
        %654 = vmatprep.mubr.bf16.mxu0 0
        %655 = vmatmul.mubr.bf16.gmra.mrb[0].mxu0 %v486
        %v656 = vpop.f32.mrb[0].mxu0
        %v657 = vadd.f32 0.0, %v656
        %v658 = vpop.f32.mrb[0].mxu0
        %v659 = vpop.f32.mrb[0].mxu0
        %v660 = vadd.f32 0.0, %v659
        %v661 = vpop.f32.mrb[0].mxu0
        %662 = vmatprep.mubr.bf16.mxu0 0
        %663 = vmatmul.mubr.bf16.gmra.mrb[0].mxu0 %v487
        %v664 = vpop.f32.mrb[0].mxu0
        %v665 = vadd.f32 0.0, %v664
        %v666 = vpop.f32.mrb[0].mxu0
        %v667 = vpop.f32.mrb[0].mxu0
        %v668 = vadd.f32 0.0, %v667
        %v669 = vpop.f32.mrb[0].mxu0
        %670 = vmatprep.mubr.bf16.mxu0 0
        %671 = vmatmul.mubr.bf16.gmra.mrb[0].mxu0 %v488
        %v672 = vpop.f32.mrb[0].mxu0
        %v673 = vadd.f32 0.0, %v672
        %v674 = vpop.f32.mrb[0].mxu0
        %v675 = vpop.f32.mrb[0].mxu0
        %v676 = vadd.f32 0.0, %v675
        %v677 = vpop.f32.mrb[0].mxu0
        %678 = vmatprep.mubr.bf16.mxu0 0
        %679 = vmatmul.mubr.bf16.gmra.mrb[0].mxu0 %v489
        %v680 = vpop.f32.mrb[0].mxu0
        %v681 = vadd.f32 0.0, %v680
        %v682 = vpop.f32.mrb[0].mxu0
        %v683 = vpop.f32.mrb[0].mxu0
        %v684 = vadd.f32 0.0, %v683
        %v685 = vpop.f32.mrb[0].mxu0
        %686 = vmatprep.mubr.bf16.mxu0 0
        %687 = vmatmul.mubr.bf16.gmra.mrb[0].mxu0 %v490
        %v688 = vpop.f32.mrb[0].mxu0
        %v689 = vadd.f32 0.0, %v688
        %v690 = vpop.f32.mrb[0].mxu0
        %v691 = vpop.f32.mrb[0].mxu0
        %v692 = vadd.f32 0.0, %v691
        %v693 = vpop.f32.mrb[0].mxu0
        %694 = vmatprep.mubr.bf16.mxu0 0
        %695 = vmatmul.mubr.bf16.gmra.mrb[0].mxu0 %v491
        %v696 = vpop.f32.mrb[0].mxu0
        %v697 = vadd.f32 0.0, %v696
        %v698 = vpop.f32.mrb[0].mxu0
        %v699 = vpop.f32.mrb[0].mxu0
        %v700 = vadd.f32 0.0, %v699
        %v701 = vpop.f32.mrb[0].mxu0
        %702 = vmatprep.mubr.bf16.mxu0 0
        %703 = vmatmul.mubr.bf16.gmra.mrb[0].mxu0 %v492
        %v704 = vpop.f32.mrb[0].mxu0
        %v705 = vadd.f32 0.0, %v704
        %v706 = vpop.f32.mrb[0].mxu0
        %v707 = vpop.f32.mrb[0].mxu0
        %v708 = vadd.f32 0.0, %v707
        %v709 = vpop.f32.mrb[0].mxu0
        %710 = vmatprep.mubr.bf16.mxu0 0
        %711 = vmatmul.mubr.bf16.gmra.mrb[0].mxu0 %v493
        %v712 = vpop.f32.mrb[0].mxu0
        %v713 = vadd.f32 0.0, %v712
        %v714 = vpop.f32.mrb[0].mxu0
        %v715 = vpop.f32.mrb[0].mxu0
        %v716 = vadd.f32 0.0, %v715
        %v717 = vpop.f32.mrb[0].mxu0
        %718 = vdwg.mxu0
        %v719 = vadd.f32 %v366, %v593
        %v720 = vadd.f32 %v367, %v596
        %v721 = vadd.f32 %v368, %v601
        %v722 = vadd.f32 %v369, %v604
        %v723 = vadd.f32 %v370, %v609
        %v724 = vadd.f32 %v371, %v612
        %v725 = vadd.f32 %v372, %v617
        %v726 = vadd.f32 %v373, %v620
        %v727 = vadd.f32 %v374, %v625
        %v728 = vadd.f32 %v375, %v628
        %v729 = vadd.f32 %v376, %v633
        %v730 = vadd.f32 %v377, %v636
        %v731 = vadd.f32 %v378, %v641
        %v732 = vadd.f32 %v379, %v644
        %v733 = vadd.f32 %v380, %v649
        %v734 = vadd.f32 %v381, %v652
        %v735 = vadd.f32 %v382, %v657
        %v736 = vadd.f32 %v383, %v660
        %v737 = vadd.f32 %v384, %v665
        %v738 = vadd.f32 %v385, %v668
        %v739 = vadd.f32 %v386, %v673
        %v740 = vadd.f32 %v387, %v676
        %v741 = vadd.f32 %v388, %v681
        %v742 = vadd.f32 %v389, %v684
        %v743 = vadd.f32 %v390, %v689
        %v744 = vadd.f32 %v391, %v692
        %v745 = vadd.f32 %v392, %v697
        %v746 = vadd.f32 %v393, %v700
        %v747 = vadd.f32 %v394, %v705
        %v748 = vadd.f32 %v395, %v708
        %v749 = vadd.f32 %v396, %v713
        %v750 = vadd.f32 %v397, %v716
        %751 = vst [vmem:[#allocation2] sm:$0xff] %v719
        %752 = vst [vmem:[#allocation2 + $0x8] sm:$0xff] %v720
        %753 = vst [vmem:[#allocation2 + $0x10] sm:$0xff] %v721
        %754 = vst [vmem:[#allocation2 + $0x18] sm:$0xff] %v722
        %755 = vst [vmem:[#allocation2 + $0x20] sm:$0xff] %v723
        %756 = vst [vmem:[#allocation2 + $0x28] sm:$0xff] %v724
        %757 = vst [vmem:[#allocation2 + $0x30] sm:$0xff] %v725
        %758 = vst [vmem:[#allocation2 + $0x38] sm:$0xff] %v726
        %759 = vst [vmem:[#allocation2 + $0x40] sm:$0xff] %v727
        %760 = vst [vmem:[#allocation2 + $0x48] sm:$0xff] %v728
        %761 = vst [vmem:[#allocation2 + $0x50] sm:$0xff] %v729
        %762 = vst [vmem:[#allocation2 + $0x58] sm:$0xff] %v730
        %763 = vst [vmem:[#allocation2 + $0x60] sm:$0xff] %v731
        %764 = vst [vmem:[#allocation2 + $0x68] sm:$0xff] %v732
        %765 = vst [vmem:[#allocation2 + $0x70] sm:$0xff] %v733
        %766 = vst [vmem:[#allocation2 + $0x78] sm:$0xff] %v734
        %767 = vst [vmem:[#allocation2 + $0x80] sm:$0xff] %v735
        %768 = vst [vmem:[#allocation2 + $0x88] sm:$0xff] %v736
        %769 = vst [vmem:[#allocation2 + $0x90] sm:$0xff] %v737
        %770 = vst [vmem:[#allocation2 + $0x98] sm:$0xff] %v738
        %771 = vst [vmem:[#allocation2 + $0xa0] sm:$0xff] %v739
        %772 = vst [vmem:[#allocation2 + $0xa8] sm:$0xff] %v740
        %773 = vst [vmem:[#allocation2 + $0xb0] sm:$0xff] %v741
        %774 = vst [vmem:[#allocation2 + $0xb8] sm:$0xff] %v742
        %775 = vst [vmem:[#allocation2 + $0xc0] sm:$0xff] %v743
        %776 = vst [vmem:[#allocation2 + $0xc8] sm:$0xff] %v744
        %777 = vst [vmem:[#allocation2 + $0xd0] sm:$0xff] %v745
        %778 = vst [vmem:[#allocation2 + $0xd8] sm:$0xff] %v746
        %779 = vst [vmem:[#allocation2 + $0xe0] sm:$0xff] %v747
        %780 = vst [vmem:[#allocation2 + $0xe8] sm:$0xff] %v748
        %781 = vst [vmem:[#allocation2 + $0xf0] sm:$0xff] %v749
        %782 = vst [vmem:[#allocation2 + $0xf8] sm:$0xff] %v750
        // Predicated region
        $region49: #{tpu_custom_call.1} parent=35 // pred_check
          %p783 = pneg %p298
        $region50: #{tpu_custom_call.1} parent=35 // pred_check_branch
          %785 = sbr.rel (%p783) target = $region52
        $region51: #{tpu_custom_call.1} parent=35 // pred_region
          %v786 = vld [vmem:[#allocation2] sm:$0xff]
          %v787 = vld [vmem:[#allocation2 + $0x8] sm:$0xff]
          %v788 = vld [vmem:[#allocation2 + $0x10] sm:$0xff]
          %v789 = vld [vmem:[#allocation2 + $0x18] sm:$0xff]
          %v790 = vld [vmem:[#allocation2 + $0x20] sm:$0xff]
          %v791 = vld [vmem:[#allocation2 + $0x28] sm:$0xff]
          %v792 = vld [vmem:[#allocation2 + $0x30] sm:$0xff]
          %v793 = vld [vmem:[#allocation2 + $0x38] sm:$0xff]
          %v794 = vld [vmem:[#allocation2 + $0x40] sm:$0xff]
          %v795 = vld [vmem:[#allocation2 + $0x48] sm:$0xff]
          %v796 = vld [vmem:[#allocation2 + $0x50] sm:$0xff]
          %v797 = vld [vmem:[#allocation2 + $0x58] sm:$0xff]
          %v798 = vld [vmem:[#allocation2 + $0x60] sm:$0xff]
          %v799 = vld [vmem:[#allocation2 + $0x68] sm:$0xff]
          %v800 = vld [vmem:[#allocation2 + $0x70] sm:$0xff]
          %v801 = vld [vmem:[#allocation2 + $0x78] sm:$0xff]
          %v802 = vld [vmem:[#allocation2 + $0x80] sm:$0xff]
          %v803 = vld [vmem:[#allocation2 + $0x88] sm:$0xff]
          %v804 = vld [vmem:[#allocation2 + $0x90] sm:$0xff]
          %v805 = vld [vmem:[#allocation2 + $0x98] sm:$0xff]
          %v806 = vld [vmem:[#allocation2 + $0xa0] sm:$0xff]
          %v807 = vld [vmem:[#allocation2 + $0xa8] sm:$0xff]
          %v808 = vld [vmem:[#allocation2 + $0xb0] sm:$0xff]
          %v809 = vld [vmem:[#allocation2 + $0xb8] sm:$0xff]
          %v810 = vld [vmem:[#allocation2 + $0xc0] sm:$0xff]
          %v811 = vld [vmem:[#allocation2 + $0xc8] sm:$0xff]
          %v812 = vld [vmem:[#allocation2 + $0xd0] sm:$0xff]
          %v813 = vld [vmem:[#allocation2 + $0xd8] sm:$0xff]
          %v814 = vld [vmem:[#allocation2 + $0xe0] sm:$0xff]
          %v815 = vld [vmem:[#allocation2 + $0xe8] sm:$0xff]
          %v816 = vld [vmem:[#allocation2 + $0xf0] sm:$0xff]
          %v817 = vld [vmem:[#allocation2 + $0xf8] sm:$0xff]
          %v818 = vld [vmem:[%s292] sm:$0x1]
          %v820 = vlaneseq
          %v821 = vshrl.u32 %v820, 7
          %v822 = vsub.s32 0, %v821
          %v823 = vrot.slane %v818, %v822
          %v825 = vmul.f32 %v786, %v823
          %v826 = vmul.f32 %v787, %v823
          %v827 = vmul.f32 %v788, %v823
          %v828 = vmul.f32 %v789, %v823
          %v829 = vmul.f32 %v790, %v823
          %v830 = vmul.f32 %v791, %v823
          %v831 = vmul.f32 %v792, %v823
          %v832 = vmul.f32 %v793, %v823
          %v833 = vmul.f32 %v794, %v823
          %v834 = vmul.f32 %v795, %v823
          %v835 = vmul.f32 %v796, %v823
          %v836 = vmul.f32 %v797, %v823
          %v837 = vmul.f32 %v798, %v823
          %v838 = vmul.f32 %v799, %v823
          %v839 = vmul.f32 %v800, %v823
          %v840 = vmul.f32 %v801, %v823
          %v841 = vmul.f32 %v802, %v823
          %v842 = vmul.f32 %v803, %v823
          %v843 = vmul.f32 %v804, %v823
          %v844 = vmul.f32 %v805, %v823
          %v845 = vmul.f32 %v806, %v823
          %v846 = vmul.f32 %v807, %v823
          %v847 = vmul.f32 %v808, %v823
          %v848 = vmul.f32 %v809, %v823
          %v849 = vmul.f32 %v810, %v823
          %v850 = vmul.f32 %v811, %v823
          %v851 = vmul.f32 %v812, %v823
          %v852 = vmul.f32 %v813, %v823
          %v853 = vmul.f32 %v814, %v823
          %v854 = vmul.f32 %v815, %v823
          %v855 = vmul.f32 %v816, %v823
          %v856 = vmul.f32 %v817, %v823
          %v857 = vld [vmem:[%s295] sm:$0x1]
          %v859 = vlaneseq
          %v860 = vshrl.u32 %v859, 7
          %v861 = vsub.s32 0, %v860
          %v862 = vrot.slane %v857, %v861
          %v864 = vadd.f32 %v825, %v862
          %v865 = vadd.f32 %v826, %v862
          %v866 = vadd.f32 %v827, %v862
          %v867 = vadd.f32 %v828, %v862
          %v868 = vadd.f32 %v829, %v862
          %v869 = vadd.f32 %v830, %v862
          %v870 = vadd.f32 %v831, %v862
          %v871 = vadd.f32 %v832, %v862
          %v872 = vadd.f32 %v833, %v862
          %v873 = vadd.f32 %v834, %v862
          %v874 = vadd.f32 %v835, %v862
          %v875 = vadd.f32 %v836, %v862
          %v876 = vadd.f32 %v837, %v862
          %v877 = vadd.f32 %v838, %v862
          %v878 = vadd.f32 %v839, %v862
          %v879 = vadd.f32 %v840, %v862
          %v880 = vadd.f32 %v841, %v862
          %v881 = vadd.f32 %v842, %v862
          %v882 = vadd.f32 %v843, %v862
          %v883 = vadd.f32 %v844, %v862
          %v884 = vadd.f32 %v845, %v862
          %v885 = vadd.f32 %v846, %v862
          %v886 = vadd.f32 %v847, %v862
          %v887 = vadd.f32 %v848, %v862
          %v888 = vadd.f32 %v849, %v862
          %v889 = vadd.f32 %v850, %v862
          %v890 = vadd.f32 %v851, %v862
          %v891 = vadd.f32 %v852, %v862
          %v892 = vadd.f32 %v853, %v862
          %v893 = vadd.f32 %v854, %v862
          %v894 = vadd.f32 %v855, %v862
          %v895 = vadd.f32 %v856, %v862
          %v896 = vpack.c.bf16 %v865, %v864
          %v897 = vpack.c.bf16 %v867, %v866
          %v898 = vpack.c.bf16 %v869, %v868
          %v899 = vpack.c.bf16 %v871, %v870
          %v900 = vpack.c.bf16 %v873, %v872
          %v901 = vpack.c.bf16 %v875, %v874
          %v902 = vpack.c.bf16 %v877, %v876
          %v903 = vpack.c.bf16 %v879, %v878
          %v904 = vpack.c.bf16 %v881, %v880
          %v905 = vpack.c.bf16 %v883, %v882
          %v906 = vpack.c.bf16 %v885, %v884
          %v907 = vpack.c.bf16 %v887, %v886
          %v908 = vpack.c.bf16 %v889, %v888
          %v909 = vpack.c.bf16 %v891, %v890
          %v910 = vpack.c.bf16 %v893, %v892
          %v911 = vpack.c.bf16 %v895, %v894
          %v928 = vunpack.c.l.b16 %v896
          %v929 = vunpack.c.h.b16 %v896
          %v930 = vunpack.c.l.b16 %v897
          %v931 = vunpack.c.h.b16 %v897
          %v932 = vunpack.c.l.b16 %v898
          %v933 = vunpack.c.h.b16 %v898
          %v934 = vunpack.c.l.b16 %v899
          %v935 = vunpack.c.h.b16 %v899
          %v936 = vunpack.c.l.b16 %v900
          %v937 = vunpack.c.h.b16 %v900
          %v938 = vunpack.c.l.b16 %v901
          %v939 = vunpack.c.h.b16 %v901
          %v940 = vunpack.c.l.b16 %v902
          %v941 = vunpack.c.h.b16 %v902
          %v942 = vunpack.c.l.b16 %v903
          %v943 = vunpack.c.h.b16 %v903
          %v944 = vunpack.c.l.b16 %v904
          %v945 = vunpack.c.h.b16 %v904
          %v946 = vunpack.c.l.b16 %v905
          %v947 = vunpack.c.h.b16 %v905
          %v948 = vunpack.c.l.b16 %v906
          %v949 = vunpack.c.h.b16 %v906
          %v950 = vunpack.c.l.b16 %v907
          %v951 = vunpack.c.h.b16 %v907
          %v952 = vunpack.c.l.b16 %v908
          %v953 = vunpack.c.h.b16 %v908
          %v954 = vunpack.c.l.b16 %v909
          %v955 = vunpack.c.h.b16 %v909
          %v956 = vunpack.c.l.b16 %v910
          %v957 = vunpack.c.h.b16 %v910
          %v958 = vunpack.c.l.b16 %v911
          %v959 = vunpack.c.h.b16 %v911
          %v960 = vpack.c.b16 %v928, %v928
          %v961 = vpack.c.b16 %v929, %v929
          %v962 = vpack.c.b16 %v930, %v930
          %v963 = vpack.c.b16 %v931, %v931
          %v964 = vpack.c.b16 %v932, %v932
          %v965 = vpack.c.b16 %v933, %v933
          %v966 = vpack.c.b16 %v934, %v934
          %v967 = vpack.c.b16 %v935, %v935
          %v968 = vpack.c.b16 %v936, %v936
          %v969 = vpack.c.b16 %v937, %v937
          %v970 = vpack.c.b16 %v938, %v938
          %v971 = vpack.c.b16 %v939, %v939
          %v972 = vpack.c.b16 %v940, %v940
          %v973 = vpack.c.b16 %v941, %v941
          %v974 = vpack.c.b16 %v942, %v942
          %v975 = vpack.c.b16 %v943, %v943
          %v976 = vpack.c.b16 %v944, %v944
          %v977 = vpack.c.b16 %v945, %v945
          %v978 = vpack.c.b16 %v946, %v946
          %v979 = vpack.c.b16 %v947, %v947
          %v980 = vpack.c.b16 %v948, %v948
          %v981 = vpack.c.b16 %v949, %v949
          %v982 = vpack.c.b16 %v950, %v950
          %v983 = vpack.c.b16 %v951, %v951
          %v984 = vpack.c.b16 %v952, %v952
          %v985 = vpack.c.b16 %v953, %v953
          %v986 = vpack.c.b16 %v954, %v954
          %v987 = vpack.c.b16 %v955, %v955
          %v988 = vpack.c.b16 %v956, %v956
          %v989 = vpack.c.b16 %v957, %v957
          %v990 = vpack.c.b16 %v958, %v958
          %v991 = vpack.c.b16 %v959, %v959
          %1024 = vst [vmem:[%s287] sm:$0xf] %v960
          %1025 = vst [vmem:[%s287 + $0x4] sm:$0xf] %v961
          %1026 = vst [vmem:[%s287 + $0x8] sm:$0xf] %v962
          %1027 = vst [vmem:[%s287 + $0xc] sm:$0xf] %v963
          %1028 = vst [vmem:[%s287 + $0x10] sm:$0xf] %v964
          %1029 = vst [vmem:[%s287 + $0x14] sm:$0xf] %v965
          %1030 = vst [vmem:[%s287 + $0x18] sm:$0xf] %v966
          %1031 = vst [vmem:[%s287 + $0x1c] sm:$0xf] %v967
          %1032 = vst [vmem:[%s287 + $0x20] sm:$0xf] %v968
          %1033 = vst [vmem:[%s287 + $0x24] sm:$0xf] %v969
          %1034 = vst [vmem:[%s287 + $0x28] sm:$0xf] %v970
          %1035 = vst [vmem:[%s287 + $0x2c] sm:$0xf] %v971
          %1036 = vst [vmem:[%s287 + $0x30] sm:$0xf] %v972
          %1037 = vst [vmem:[%s287 + $0x34] sm:$0xf] %v973
          %1038 = vst [vmem:[%s287 + $0x38] sm:$0xf] %v974
          %1039 = vst [vmem:[%s287 + $0x3c] sm:$0xf] %v975
          %1040 = vst [vmem:[%s287 + $0x40] sm:$0xf] %v976
          %1041 = vst [vmem:[%s287 + $0x44] sm:$0xf] %v977
          %1042 = vst [vmem:[%s287 + $0x48] sm:$0xf] %v978
          %1043 = vst [vmem:[%s287 + $0x4c] sm:$0xf] %v979
          %1044 = vst [vmem:[%s287 + $0x50] sm:$0xf] %v980
          %1045 = vst [vmem:[%s287 + $0x54] sm:$0xf] %v981
          %1046 = vst [vmem:[%s287 + $0x58] sm:$0xf] %v982
          %1047 = vst [vmem:[%s287 + $0x5c] sm:$0xf] %v983
          %1048 = vst [vmem:[%s287 + $0x60] sm:$0xf] %v984
          %1049 = vst [vmem:[%s287 + $0x64] sm:$0xf] %v985
          %1050 = vst [vmem:[%s287 + $0x68] sm:$0xf] %v986
          %1051 = vst [vmem:[%s287 + $0x6c] sm:$0xf] %v987
          %1052 = vst [vmem:[%s287 + $0x70] sm:$0xf] %v988
          %1053 = vst [vmem:[%s287 + $0x74] sm:$0xf] %v989
          %1054 = vst [vmem:[%s287 + $0x78] sm:$0xf] %v990
          %1055 = vst [vmem:[%s287 + $0x7c] sm:$0xf] %v991
        $region52: #{tpu_custom_call.1} parent=35 // pred_fallthru
          _
        %s1056 = sand.u32 %s159, 1
        %s1057 = scalar_lea.sflag [#allocation5], %s1056
        %s1058 = sand.u32 %s159, 1
        %s1059 = smul.addr %s1058, 128
        %s1060 = scalar_lea.vmem [#allocation8], %s1059
        // Predicated region
        $region53: #{tpu_custom_call.1} parent=35 // pred_check
          %p1061 = pneg %p169
        $region54: #{tpu_custom_call.1} parent=35 // pred_check_branch
          %1063 = sbr.rel (%p1061) target = $region56
        $region55: #{tpu_custom_call.1} parent=35 // pred_region
          %s1064 = smul.u32 32, %s27
          %s1066 = ssub.s32 2048, 2048
          %1067 = vsyncadd %s1057, %s1066
          %s1068 = sadd.s32 %s28, %s1064
          %s1069 = smul.addr %s1068, 64
          %s1070 = scalar_lea.hbm %s4, %s1069
          %s1071 = sshll.u32 %s1060, 4
          %s1072 = int_to_ptr.vmem [resolvable:$true] %s1071
          %1077 = dma.vmem_to_hbm [thread:$0]  %s1072, 2048, %s1070, %s1057, 64, 64, 4
        $region56: #{tpu_custom_call.1} parent=35 // pred_fallthru
          _
      $region36: #{tpu_custom_call.1} parent=5 // pred_fallthru
        _
      %p1078 = scmp.le.s32.totalorder 2, %s17
      // Predicated region
      $region57: #{tpu_custom_call.1} parent=5 // pred_check
        %p1079 = pneg %p1078
      $region58: #{tpu_custom_call.1} parent=5 // pred_check_branch
        %1081 = sbr.rel (%p1079) target = $region60
      $region59: #{tpu_custom_call.1} parent=5 // pred_region
        %s1082 = ssub.s32 %s17, 2
        // Predicated region
        $region61: #{tpu_custom_call.1} parent=59 // pred_check
          %p1083 = pneg %p175
        $region62: #{tpu_custom_call.1} parent=59 // pred_check_branch
          %1085 = sbr.rel (%p1083) target = $region64
        $region63: #{tpu_custom_call.1} parent=59 // pred_region
          %s1086 = sand.u32 %s160, 1
          %s1087 = scalar_lea.sflag [#allocation5], %s1086
          %s1088 = sand.u32 %s160, 1
          %s1089 = smul.addr %s1088, 128
          %s1090 = scalar_lea.vmem [#allocation8], %s1089
          %1091 = dma.done %s1087, 2048
        $region64: #{tpu_custom_call.1} parent=59 // pred_fallthru
          _
      $region60: #{tpu_custom_call.1} parent=5 // pred_fallthru
        _
    $region6: #{tpu_custom_call.1} parent=1 // loop_footer
      %s21 = sadd.s32 1, %s17
    $region7: #{tpu_custom_call.1} parent=1 // loop_footer_branch
      %16 = sbr.rel target = $region3
    $region8: #{tpu_custom_call.1} parent=1 // loop_exit
      _
    %1092 = vsyncpa [#allocation4], 1
    %s1093 = scalar_lea.sflag [#allocation4], 1
    %1094 = vsyncpa %s1093, 1
    %1095 = vsyncpa [#allocation7], 1
    %1096 = vsyncpa [#allocation5], 1
    %s1097 = scalar_lea.sflag [#allocation5], 1
    %1098 = vsyncpa %s1097, 1

</llo_original>
